<compile_context>
chip_gen: v6e
topology: v6e:2x2x1
jax: 0.10.0
libtpu: 0.0.40
codegen_flags: <defaults>
</compile_context>

<pallas_src>
import jax
import jax.numpy as jnp
from jax.experimental import pallas as pl
from jax.experimental.pallas import tpu as pltpu


def _round_up(x, m):
    return ((x + m - 1) // m) * m


def _cdiv(a, b):
    return -(-a // b)


def _vmem_budget_bytes():
    """Generation-aware VMEM budget with a safe (v7x-sized) fallback."""
    cap = 64 * 1024 * 1024
    try:
        info = pltpu.get_tpu_info()
        cap = int(getattr(info, "vmem_capacity_bytes", cap))
    except Exception:
        pass
    return int(cap * 0.8)


def _make_single_k_kernel(has_bias):
    # Whole K (and usually whole N) resident in one block: no accumulator
    # scratch, no pl.when phases -- the MXU accumulates internally and the
    # result is stored once, lane-dense.
    def kernel(*refs):
        if has_bias:
            x_ref, w_ref, b_ref, o_ref = refs
        else:
            x_ref, w_ref, o_ref = refs
            b_ref = None
        acc = jnp.dot(x_ref[...], w_ref[...], preferred_element_type=jnp.float32)
        if has_bias:
            acc = acc + b_ref[...]
        o_ref[...] = acc.astype(o_ref.dtype)

    return kernel


def _make_multi_k_kernel(has_bias):
    # Fallback for very large nfeat: K innermost ("arbitrary") with an f32
    # VMEM accumulator, bias added on the last K step only.
    def kernel(*refs):
        if has_bias:
            x_ref, w_ref, b_ref, o_ref, acc_ref = refs
        else:
            x_ref, w_ref, o_ref, acc_ref = refs
            b_ref = None
        k = pl.program_id(2)

        @pl.when(k == 0)
        def _():
            acc_ref[...] = jnp.zeros_like(acc_ref)

        acc_ref[...] += jnp.dot(
            x_ref[...], w_ref[...], preferred_element_type=jnp.float32
        )

        @pl.when(k == pl.num_programs(2) - 1)
        def _():
            res = acc_ref[...]
            if has_bias:
                res = res + b_ref[...]
            o_ref[...] = res.astype(o_ref.dtype)

    return kernel


def linear_forward(x, weight, bias=None, *, tile_m=512):
    """y = x @ weight.T + bias  (matches torch nn.Linear semantics).

    x:      [M, nfeat]
    weight: [nclass, nfeat]   (PyTorch layout)
    bias:   [nclass] or None
    """
    M, nfeat = x.shape
    nclass, nfeat_w = weight.shape
    assert nfeat == nfeat_w, "weight inner dim must match x feature dim"
    has_bias = bias is not None

    itemsize = jnp.dtype(x.dtype).itemsize
    budget = _vmem_budget_bytes()

    m8 = _round_up(max(M, 1), 8)
    n128 = _round_up(nclass, 128)
    k128 = _round_up(nfeat, 128)

    # ---------------- tile selection ----------------
    tm = min(_round_up(tile_m, 8), m8)
    # Collapse N to one block for classifier-sized heads so x streams once.
    tn = n128 if n128 <= 1024 else 512
    n_full = _round_up(n128, tn)

    def _vmem_use(tk_, multi_k_):
        use = 2 * (tm * tk_ + tk_ * tn + tm * tn) * itemsize  # double-buffered
        if has_bias:
            use += 2 * tn * itemsize
        if multi_k_:
            use += tm * tn * 4  # f32 accumulator scratch
        return use

    if _vmem_use(k128, False) <= budget:
        tk = k128
        multi_k = False
    else:
        tk = 2048
        while tk > 128 and _vmem_use(tk, True) > budget:
            tk -= 128
        multi_k = True
    k_full = k128 if not multi_k else _round_up(k128, tk)

    grid_m = _cdiv(m8, tm)
    grid_n = n_full // tn

    # v7x shards "parallel" grid axes across its 2 TensorCores: keep at least
    # two parallel blocks when the batch allows it (cheap on v5e/v6e).
    if grid_m == 1 and grid_n == 1 and m8 >= 16:
        tm = _round_up(_cdiv(m8, 2), 8)
        grid_m = _cdiv(m8, tm)

    # ---------------- operand prep ----------------
    # Zero-padding is correctness-critical only on K; M is padded just to the
    # next multiple of 8 (ragged last M block handled by bounded block DMAs).
    xp = x
    if (m8, k_full) != (M, nfeat):
        xp = jnp.pad(x, ((0, m8 - M), (0, k_full - nfeat)))

    # One-time transpose of the (small) weight into canonical [K, N] MXU
    # orientation; avoids a per-tile XLU transpose inside the kernel.
    wt = weight.T
    if (k_full, n_full) != (nfeat, nclass):
        wt = jnp.pad(wt, ((0, k_full - nfeat), (0, n_full - nclass)))

    args = [xp, wt]
    if has_bias:
        bp = bias
        if n_full != nclass:
            bp = jnp.pad(bias, (0, n_full - nclass))
        args.append(bp.reshape(1, n_full))

    # ---------------- specs / grid ----------------
    if not multi_k:
        grid = (grid_m, grid_n)
        dims = ("parallel", "parallel")
        in_specs = [
            pl.BlockSpec((tm, tk), lambda i, j: (i, 0)),   # x tile
            pl.BlockSpec((tk, tn), lambda i, j: (0, j)),   # W^T tile [K, N]
        ]
        if has_bias:
            in_specs.append(pl.BlockSpec((1, tn), lambda i, j: (0, j)))
        out_spec = pl.BlockSpec((tm, tn), lambda i, j: (i, j))
        scratch = []
        kernel = _make_single_k_kernel(has_bias)
    else:
        grid_k = k_full // tk
        grid = (grid_m, grid_n, grid_k)
        dims = ("parallel", "parallel", "arbitrary")
        in_specs = [
            pl.BlockSpec((tm, tk), lambda i, j, k: (i, k)),
            pl.BlockSpec((tk, tn), lambda i, j, k: (k, j)),
        ]
        if has_bias:
            in_specs.append(pl.BlockSpec((1, tn), lambda i, j, k: (0, j)))
        out_spec = pl.BlockSpec((tm, tn), lambda i, j, k: (i, j))
        scratch = [pltpu.VMEM((tm, tn), jnp.float32)]
        kernel = _make_multi_k_kernel(has_bias)

    # Grid-aware HBM traffic: x re-read per N block, W (+bias) per M block.
    bytes_accessed = (grid_n * xp.size + grid_m * wt.size + m8 * n_full) * itemsize
    if has_bias:
        bytes_accessed += grid_m * n_full * itemsize
    cost = pl.CostEstimate(
        flops=2 * m8 * k_full * n_full,
        transcendentals=0,
        bytes_accessed=bytes_accessed,
    )

    out = pl.pallas_call(
        kernel,
        out_shape=jax.ShapeDtypeStruct((m8, n_full), x.dtype),
        grid_spec=pltpu.PrefetchScalarGridSpec(
            num_scalar_prefetch=0,
            grid=grid,
            in_specs=in_specs,
            out_specs=out_spec,
            scratch_shapes=scratch,
        ),
        compiler_params=pltpu.CompilerParams(
            dimension_semantics=dims,
            vmem_limit_bytes=budget,
        ),
        cost_estimate=cost,
    )(*args)

    if (m8, n_full) != (M, nclass):
        out = out[:M, :nclass]
    return out


if __name__ == "__main__":
    key = jax.random.PRNGKey(0)

    # --- test 1: small classifier head with bias (module's typical forward) ---
    batch, nfeat, nclass = 8, 32, 16
    kx, kw, kb, kx2, kw2 = jax.random.split(key, 5)

    bound = 1.0 / (nfeat ** 0.5)  # PyTorch nn.Linear default init range
    weight = jax.random.uniform(kw, (nclass, nfeat), jnp.float32, -bound, bound)
    bias = jax.random.uniform(kb, (nclass,), jnp.float32, -bound, bound)
    x = jax.random.normal(kx, (batch, nfeat), jnp.float32)

    y = jax.block_until_ready(linear_forward(x, weight, bias))
    y_ref = x @ weight.T + bias
    assert y.shape == (batch, nclass)
    assert jnp.allclose(y, y_ref, atol=1e-5, rtol=1e-5)

    # --- test 2: ragged batch, unaligned dims, no bias (exercises padding,
    #             no-bias path, and the 2-block parallel split) ---
    batch2, nfeat2, nclass2 = 10, 160, 24
    w2 = jax.random.uniform(kw2, (nclass2, nfeat2), jnp.float32,
                            -1.0 / (nfeat2 ** 0.5), 1.0 / (nfeat2 ** 0.5))
    x2 = jax.random.normal(kx2, (batch2, nfeat2), jnp.float32)

    y2 = jax.block_until_ready(linear_forward(x2, w2, None))
    y2_ref = x2 @ w2.T
    assert y2.shape == (batch2, nclass2)
    assert jnp.allclose(y2, y2_ref, atol=1e-5, rtol=1e-5)

    print("KERNEL_OK")
</pallas_src>

<mosaic_0001>
module attributes {stable_mosaic.version = 11 : i64} {
  func.func @kernel(%arg0: i32, %arg1: i32, %arg2: memref<8x128xf32, #tpu.memory_space<vmem>>, %arg3: memref<128x128xf32, #tpu.memory_space<vmem>>, %arg4: memref<1x128xf32, #tpu.memory_space<vmem>>, %arg5: memref<8x128xf32, #tpu.memory_space<vmem>>) attributes {dimension_semantics = [#tpu.dimension_semantics<parallel>, #tpu.dimension_semantics<parallel>], iteration_bounds = array<i64: 1, 1>, scalar_prefetch = 0 : i64, scratch_operands = 0 : i64, tpu.core_type = #tpu.core_type<tc>, window_params = [{transform_indices = @transform_0, window_bounds = array<i64: 8, 128>}, {transform_indices = @transform_1, window_bounds = array<i64: 128, 128>}, {transform_indices = @transform_2, window_bounds = array<i64: 1, 128>}, {transform_indices = @transform_3, window_bounds = array<i64: 8, 128>}]} {
    %c0 = arith.constant 0 : index
    %c0_0 = arith.constant 0 : index
    %0 = vector.load %arg2[%c0, %c0_0] : memref<8x128xf32, #tpu.memory_space<vmem>>, vector<8x128xf32>
    %c0_1 = arith.constant 0 : index
    %c0_2 = arith.constant 0 : index
    %1 = vector.load %arg3[%c0_1, %c0_2] : memref<128x128xf32, #tpu.memory_space<vmem>>, vector<128x128xf32>
    %cst = arith.constant dense<0.000000e+00> : vector<8x128xf32>
    %2 = tpu.matmul %0, %1, %cst {dimension_numbers = #tpu.dot_dimension_numbers<[1], [0], [0], [1], [0, 0, 1, 1], [], []>} : vector<8x128xf32>, vector<128x128xf32>, vector<8x128xf32> -> vector<8x128xf32>
    %c0_3 = arith.constant 0 : index
    %c0_4 = arith.constant 0 : index
    %3 = vector.load %arg4[%c0_3, %c0_4] : memref<1x128xf32, #tpu.memory_space<vmem>>, vector<1x128xf32>
    %4 = vector.broadcast %3 : vector<1x128xf32> to vector<8x128xf32>
    %5 = arith.addf %2, %4 : vector<8x128xf32>
    %c0_5 = arith.constant 0 : index
    %c0_6 = arith.constant 0 : index
    %6 = vector.load %arg5[%c0_5, %c0_6] : memref<8x128xf32, #tpu.memory_space<vmem>>, vector<8x128xf32>
    tpu.vector_store %arg5[%c0_5, %c0_6], %5 {strides = array<i32>} : memref<8x128xf32, #tpu.memory_space<vmem>>, vector<8x128xf32>,
    return
  }
  func.func @transform_0(%arg0: i32, %arg1: i32) -> (i32, i32) {
    %c0_i32 = arith.constant 0 : i32
    %c0_i32_0 = arith.constant 0 : i32
    return %arg0, %c0_i32 : i32, i32
  }
  func.func @transform_1(%arg0: i32, %arg1: i32) -> (i32, i32) {
    %c0_i32 = arith.constant 0 : i32
    %c0_i32_0 = arith.constant 0 : i32
    return %c0_i32, %arg1 : i32, i32
  }
  func.func @transform_2(%arg0: i32, %arg1: i32) -> (i32, i32) {
    %c0_i32 = arith.constant 0 : i32
    %c0_i32_0 = arith.constant 0 : i32
    return %c0_i32, %arg1 : i32, i32
  }
  func.func @transform_3(%arg0: i32, %arg1: i32) -> (i32, i32) {
    %c0_i32 = arith.constant 0 : i32
    return %arg0, %arg1 : i32, i32
  }
}

</mosaic_0001>

<llo_original>
// kernel: tpu_custom_call.1
$region0: #{tpu_custom_call.1}
  #allocation0 [shape = 'u32[]', space=smem, size = 0x4, offset = 0x4, fixed_abs, tag = 'smem constant byte address 0x4 - core index']
  #allocation1 [shape = 'u32[144,128]{1,0:T(1,128)}', space=vmem, size = 0x12000, scoped, tag = 'internal scratch']
  %s0 = inlined_call_operand.hbm [shape: f32[8,128], index: 0, kind: input, shape index: {}]
  %s1 = inlined_call_operand.hbm [shape: f32[128,128], index: 1, kind: input, shape index: {}]
  %s2 = inlined_call_operand.vmem [shape: f32[1,128], index: 2, kind: input, shape index: {}]
  %s3 = inlined_call_operand.hbm [shape: f32[8,128], index: 3, kind: output, shape index: {}]
  %s4 = sld [smem:[#allocation0]]
  $region30: #{tpu_custom_call.1} parent=0
    _
  %s6 = ssub.s32 1, %s4
  %s7 = scalar_select 0, %s6, %s4
  $region1: #{tpu_custom_call.1} parent=0
    #allocation2 [shape = 'u8[4096]{0}', space=vmem, size = 0x1000, scoped, tag = 'input window, operand 0, single buffered']
    #allocation3 [shape = 's32[1]{0}', space=sflag, size = 0x4, scoped, tag = 'scoped memory for tpu_custom_call.1']
    #allocation4 [shape = 's32[1]{0}', space=sflag, size = 0x4, scoped, tag = 'scoped memory for tpu_custom_call.1']
    #allocation5 [shape = 'u8[65536]{0}', space=vmem, size = 0x10000, scoped, tag = 'input window, operand 1, single buffered']
    #allocation6 [shape = 's32[1]{0}', space=sflag, size = 0x4, scoped, tag = 'scoped memory for tpu_custom_call.1']
    #allocation7 [shape = 'u8[4096]{0}', space=vmem, size = 0x1000, scoped, tag = 'output window, operand 0, single buffered']
    %8 = vsyncpa [#allocation3], 0
    %9 = vsyncpa [#allocation6], 0
    %10 = vsyncpa [#allocation4], 0
    // Predicated region
    $region2: #{tpu_custom_call.1} parent=1 // pred_check
      _
    $region3: #{tpu_custom_call.1} parent=1 // pred_check_branch
      %12 = sbr.rel (0) target = $region5
    $region4: #{tpu_custom_call.1} parent=1 // pred_region
      %s14 = ssub.s32 128, 128
      %15 = vsyncadd [#allocation3], %s14
      %s17 = sshll.u32 [#allocation2], 4
      %s18 = int_to_ptr.vmem [resolvable:$true] %s17
      %20 = dma.hbm_to_vmem [thread:$0]  %s0, 128, %s18, [#allocation3]
    $region5: #{tpu_custom_call.1} parent=1 // pred_fallthru
      _
    // Predicated region
    $region6: #{tpu_custom_call.1} parent=1 // pred_check
      _
    $region7: #{tpu_custom_call.1} parent=1 // pred_check_branch
      %22 = sbr.rel (0) target = $region9
    $region8: #{tpu_custom_call.1} parent=1 // pred_region
      %s24 = ssub.s32 2048, 2048
      %25 = vsyncadd [#allocation6], %s24
      %s26 = sshll.u32 [#allocation5], 4
      %s27 = int_to_ptr.vmem [resolvable:$true] %s26
      %32 = dma.hbm_to_vmem [thread:$0]  %s1, 2048, %s27, [#allocation6], 128, 128, 8
    $region9: #{tpu_custom_call.1} parent=1 // pred_fallthru
      _
    // Predicated region
    $region10: #{tpu_custom_call.1} parent=1 // pred_check
      _
    $region11: #{tpu_custom_call.1} parent=1 // pred_check_branch
      %34 = sbr.rel (0) target = $region13
    $region12: #{tpu_custom_call.1} parent=1 // pred_region
      _
    $region13: #{tpu_custom_call.1} parent=1 // pred_fallthru
      _
    // Predicated region
    $region14: #{tpu_custom_call.1} parent=1 // pred_check
      _
    $region15: #{tpu_custom_call.1} parent=1 // pred_check_branch
      %36 = sbr.rel (0) target = $region17
    $region16: #{tpu_custom_call.1} parent=1 // pred_region
      %37 = dma.done [#allocation3], 128
    $region17: #{tpu_custom_call.1} parent=1 // pred_fallthru
      _
    // Predicated region
    $region18: #{tpu_custom_call.1} parent=1 // pred_check
      _
    $region19: #{tpu_custom_call.1} parent=1 // pred_check_branch
      %39 = sbr.rel (0) target = $region21
    $region20: #{tpu_custom_call.1} parent=1 // pred_region
      %40 = dma.done [#allocation6], 2048
    $region21: #{tpu_custom_call.1} parent=1 // pred_fallthru
      _
    %v41 = vld [vmem:[#allocation2] sm:$0xff]
    %v42 = vld [vmem:[#allocation5] sm:$0xff]
    %v43 = vld [vmem:[#allocation5 + $0x8] sm:$0xff]
    %v44 = vld [vmem:[#allocation5 + $0x10] sm:$0xff]
    %v45 = vld [vmem:[#allocation5 + $0x18] sm:$0xff]
    %v46 = vld [vmem:[#allocation5 + $0x20] sm:$0xff]
    %v47 = vld [vmem:[#allocation5 + $0x28] sm:$0xff]
    %v48 = vld [vmem:[#allocation5 + $0x30] sm:$0xff]
    %v49 = vld [vmem:[#allocation5 + $0x38] sm:$0xff]
    %v50 = vld [vmem:[#allocation5 + $0x40] sm:$0xff]
    %v51 = vld [vmem:[#allocation5 + $0x48] sm:$0xff]
    %v52 = vld [vmem:[#allocation5 + $0x50] sm:$0xff]
    %v53 = vld [vmem:[#allocation5 + $0x58] sm:$0xff]
    %v54 = vld [vmem:[#allocation5 + $0x60] sm:$0xff]
    %v55 = vld [vmem:[#allocation5 + $0x68] sm:$0xff]
    %v56 = vld [vmem:[#allocation5 + $0x70] sm:$0xff]
    %v57 = vld [vmem:[#allocation5 + $0x78] sm:$0xff]
    %v58 = vld [vmem:[%s2] sm:$0x1]
    %v60 = vlaneseq
    %v61 = vshrl.u32 %v60, 7
    %v62 = vsub.s32 0, %v61
    %v63 = vrot.slane %v58, %v62
    %65 = vmatprep.subr.mxu0 0.0
    %66 = vmatpush1.msra.mxu0 %v57
    %67 = vmatprep.subr.mxu0 0.0
    %68 = vmatpush1.msra.mxu0 %v56
    %69 = vmatprep.subr.mxu0 0.0
    %70 = vmatpush1.msra.mxu0 %v55
    %71 = vmatprep.subr.mxu0 0.0
    %72 = vmatpush1.msra.mxu0 %v54
    %73 = vmatprep.subr.mxu0 0.0
    %74 = vmatpush1.msra.mxu0 %v53
    %75 = vmatprep.subr.mxu0 0.0
    %76 = vmatpush1.msra.mxu0 %v52
    %77 = vmatprep.subr.mxu0 0.0
    %78 = vmatpush1.msra.mxu0 %v51
    %79 = vmatprep.subr.mxu0 0.0
    %80 = vmatpush1.msra.mxu0 %v50
    %81 = vmatprep.subr.mxu0 0.0
    %82 = vmatpush1.msra.mxu0 %v49
    %83 = vmatprep.subr.mxu0 0.0
    %84 = vmatpush1.msra.mxu0 %v48
    %85 = vmatprep.subr.mxu0 0.0
    %86 = vmatpush1.msra.mxu0 %v47
    %87 = vmatprep.subr.mxu0 0.0
    %88 = vmatpush1.msra.mxu0 %v46
    %89 = vmatprep.subr.mxu0 0.0
    %90 = vmatpush1.msra.mxu0 %v45
    %91 = vmatprep.subr.mxu0 0.0
    %92 = vmatpush1.msra.mxu0 %v44
    %93 = vmatprep.subr.mxu0 0.0
    %94 = vmatpush1.msra.mxu0 %v43
    %95 = vmatprep.subr.mxu0 0.0
    %96 = vmatpush1.msra.mxu0 %v42
    %97 = vmatprep.subr.mxu0 0.0
    %98 = vmatpush2.msra.mxu0 0.0
    %99 = vmatprep.subr.mxu0 0.0
    %100 = vmatpush2.msra.mxu0 0.0
    %101 = vmatprep.subr.mxu0 0.0
    %102 = vmatpush2.msra.mxu0 0.0
    %103 = vmatprep.subr.mxu0 0.0
    %104 = vmatpush2.msra.mxu0 0.0
    %105 = vmatprep.subr.mxu0 0.0
    %106 = vmatpush2.msra.mxu0 0.0
    %107 = vmatprep.subr.mxu0 0.0
    %108 = vmatpush2.msra.mxu0 0.0
    %109 = vmatprep.subr.mxu0 0.0
    %110 = vmatpush2.msra.mxu0 0.0
    %111 = vmatprep.subr.mxu0 0.0
    %112 = vmatpush2.msra.mxu0 0.0
    %113 = vmatprep.subr.mxu0 0.0
    %114 = vmatpush2.msra.mxu0 0.0
    %115 = vmatprep.subr.mxu0 0.0
    %116 = vmatpush2.msra.mxu0 0.0
    %117 = vmatprep.subr.mxu0 0.0
    %118 = vmatpush2.msra.mxu0 0.0
    %119 = vmatprep.subr.mxu0 0.0
    %120 = vmatpush2.msra.mxu0 0.0
    %121 = vmatprep.subr.mxu0 0.0
    %122 = vmatpush2.msra.mxu0 0.0
    %123 = vmatprep.subr.mxu0 0.0
    %124 = vmatpush2.msra.mxu0 0.0
    %125 = vmatprep.subr.mxu0 0.0
    %126 = vmatpush2.msra.mxu0 0.0
    %127 = vmatprep.subr.mxu0 0.0
    %128 = vmatpush2.msra.mxu0 0.0
    %129 = vmatprep.mubr.f32.mxu0 0.0
    %130 = vmatmul.mubr.f32.gmra.mxu0 %v41
    %v131 = vpop.f32.mrf.mxu0
    %v132 = vadd.f32 %v63, %v131
    %v133 = vpop.f32.mrf.mxu0
    %134 = vdwg.mxu0
    %135 = vst [vmem:[#allocation7] sm:$0xff] %v132
    // Predicated region
    $region22: #{tpu_custom_call.1} parent=1 // pred_check
      _
    $region23: #{tpu_custom_call.1} parent=1 // pred_check_branch
      %137 = sbr.rel (0) target = $region25
    $region24: #{tpu_custom_call.1} parent=1 // pred_region
      %s139 = ssub.s32 128, 128
      %140 = vsyncadd [#allocation4], %s139
      %s142 = sshll.u32 [#allocation7], 4
      %s143 = int_to_ptr.vmem [resolvable:$true] %s142
      %145 = dma.vmem_to_hbm [thread:$0]  %s143, 128, %s3, [#allocation4]
    $region25: #{tpu_custom_call.1} parent=1 // pred_fallthru
      _
    // Predicated region
    $region26: #{tpu_custom_call.1} parent=1 // pred_check
      _
    $region27: #{tpu_custom_call.1} parent=1 // pred_check_branch
      %147 = sbr.rel (0) target = $region29
    $region28: #{tpu_custom_call.1} parent=1 // pred_region
      %148 = dma.done [#allocation4], 128
    $region29: #{tpu_custom_call.1} parent=1 // pred_fallthru
      _
    %149 = vsyncpa [#allocation3], 1
    %150 = vsyncpa [#allocation6], 1
    %151 = vsyncpa [#allocation4], 1

</llo_original>
